<compile_context>
chip_gen: v7x
topology: tpu7x:2x2x1
jax: 0.10.0
libtpu: 0.0.40
codegen_flags: <defaults>
</compile_context>

<pallas_src>
import jax
import jax.numpy as jnp
from jax.experimental import pallas as pl
from jax.experimental.pallas import tpu as pltpu


def _round_up(x: int, m: int) -> int:
    return ((x + m - 1) // m) * m


def _single_k_kernel(p_ref, w_ref, b_ref, o_ref):
    # p_ref: (tm, K)  w_ref: (K, tn)  b_ref: (1, tn) f32  o_ref: (tm, tn)
    # Full-K tile: one MXU pass, each output tile written exactly once.
    acc = jnp.dot(p_ref[...], w_ref[...], preferred_element_type=jnp.float32)
    o_ref[...] = (acc + b_ref[...]).astype(o_ref.dtype)


def _split_k_kernel(p_ref, w_ref, b_ref, o_ref, acc_ref):
    # Fallback for very large K (never hit for normal ViT patch embeds).
    k = pl.program_id(2)

    @pl.when(k == 0)
    def _():
        acc_ref[...] = jnp.zeros_like(acc_ref)

    acc_ref[...] += jnp.dot(p_ref[...], w_ref[...],
                            preferred_element_type=jnp.float32)

    @pl.when(k == pl.num_programs(2) - 1)
    def _():
        o_ref[...] = (acc_ref[...] + b_ref[...]).astype(o_ref.dtype)


def patch_embeddings(x, weight, bias, patch_size, *,
                     tm_max=512, tn_max=2048, tk_max=4096,
                     mxu_dtype=jnp.bfloat16,
                     vmem_budget_bytes=14 * 1024 * 1024):
    """x: (B, C, H, W); weight: (d_model, C, P, P); bias: (d_model,).

    Returns (B, num_patches, d_model), matching
    Conv2d(stride=P, kernel=P)(x).flatten(2).transpose(1, 2).
    """
    B, C, H, W = x.shape
    D = weight.shape[0]
    P = patch_size
    Hp, Wp = H // P, W // P
    N = Hp * Wp
    K = C * P * P
    M = B * N

    out_dtype = x.dtype
    op_dtype = jnp.dtype(mxu_dtype) if mxu_dtype is not None else jnp.dtype(x.dtype)
    psize = jnp.dtype(op_dtype).itemsize
    osize = jnp.dtype(out_dtype).itemsize
    # Minimum sublane tile depends on operand width (8 f32 / 16 bf16 / 32 int8).
    sub = 8 if psize >= 4 else (16 if psize == 2 else 32)

    # --- im2col in the wrapper, fused with the bf16 cast (single copy) -----
    # (B, C, Hp, ph, Wp, pw) -> (B, Hp, Wp, C, ph, pw) -> (B*N, C*P*P)
    patches = (x.reshape(B, C, Hp, P, Wp, P)
               .transpose(0, 2, 4, 1, 3, 5)
               .reshape(M, K)
               .astype(op_dtype))
    w2d = weight.reshape(D, K).T.astype(op_dtype)      # (K, D), (c, ph, pw) order
    b2d = bias.reshape(1, D).astype(jnp.float32)       # bias added in f32

    # --- D (lane) tiling: keep the whole weight VMEM-resident if possible ---
    if D <= tn_max:
        tn, Dp = D, D
    else:
        tn = tn_max                                    # multiple of 128
        Dp = _round_up(D, tn)

    # --- K: un-tiled whenever it fits one step (block == full extent, no pad)
    split_k = K > tk_max
    if split_k:
        tk = _round_up(min(tk_max, K), 128)
        Kp = _round_up(K, tk)
    else:
        tk, Kp = K, K

    # --- M (sublane) tiling --------------------------------------------------
    tm = min(tm_max, _round_up(M, sub))
    if pl.cdiv(M, tm) == 1 and M > sub:
        # Keep >=2 M tiles so both v7x TensorCores get work.
        tm = _round_up(pl.cdiv(M, 2), sub)

    # Shrink tm so the double-buffered per-step footprint fits the smallest
    # scoped-VMEM default (v5e ~16 MiB); v6e/v7x then have ample headroom.
    def _vmem_est(tm_):
        per = (tm_ * tk * psize + tk * tn * psize + tn * 4 + tm_ * tn * osize)
        if split_k:
            per += tm_ * tn * 4                        # f32 accumulator scratch
        return 2 * per                                 # double buffering

    while _vmem_est(tm) > vmem_budget_bytes and tm > sub:
        tm = max(sub, _round_up(tm // 2, sub))

    grid_m = pl.cdiv(M, tm)
    grid_n = Dp // tn

    # Pad only where correctness demands it: K on the (rare) split-K path,
    # D when d_model is split into equal lane tiles.  The big (M, K) slab is
    # never padded along M — partial edge blocks are masked on writeback.
    if split_k and Kp != K:
        patches = jnp.pad(patches, ((0, 0), (0, Kp - K)))
        w2d = jnp.pad(w2d, ((0, Kp - K), (0, 0)))
    if Dp != D:
        w2d = jnp.pad(w2d, ((0, 0), (0, Dp - D)))
        b2d = jnp.pad(b2d, ((0, 0), (0, Dp - D)))

    cost = pl.CostEstimate(
        flops=2 * M * K * D,
        transcendentals=0,
        bytes_accessed=M * K * psize + K * D * psize + D * 4 + M * D * osize,
    )

    if not split_k:
        out = pl.pallas_call(
            _single_k_kernel,
            out_shape=jax.ShapeDtypeStruct((M, Dp), out_dtype),
            grid_spec=pltpu.PrefetchScalarGridSpec(
                num_scalar_prefetch=0,
                grid=(grid_m, grid_n),
                in_specs=[
                    pl.BlockSpec((tm, K), lambda i, j: (i, 0)),
                    # Grid-invariant over the M axis: weight/bias are DMA'd
                    # once per D tile and then stay resident in VMEM.
                    pl.BlockSpec((K, tn), lambda i, j: (0, j)),
                    pl.BlockSpec((1, tn), lambda i, j: (0, j)),
                ],
                out_specs=pl.BlockSpec((tm, tn), lambda i, j: (i, j)),
            ),
            compiler_params=pltpu.CompilerParams(
                dimension_semantics=("parallel", "parallel"),
            ),
            cost_estimate=cost,
        )(patches, w2d, b2d)
    else:
        out = pl.pallas_call(
            _split_k_kernel,
            out_shape=jax.ShapeDtypeStruct((M, Dp), out_dtype),
            grid_spec=pltpu.PrefetchScalarGridSpec(
                num_scalar_prefetch=0,
                grid=(grid_m, grid_n, Kp // tk),
                in_specs=[
                    pl.BlockSpec((tm, tk), lambda i, j, k: (i, k)),
                    pl.BlockSpec((tk, tn), lambda i, j, k: (k, j)),
                    pl.BlockSpec((1, tn), lambda i, j, k: (0, j)),
                ],
                out_specs=pl.BlockSpec((tm, tn), lambda i, j, k: (i, j)),
                scratch_shapes=[pltpu.VMEM((tm, tn), jnp.float32)],
            ),
            compiler_params=pltpu.CompilerParams(
                dimension_semantics=("parallel", "parallel", "arbitrary"),
            ),
            cost_estimate=cost,
        )(patches, w2d, b2d)

    if Dp != D:
        out = out[:, :D]
    return out.reshape(B, N, D)


if __name__ == "__main__":
    # Small shapes consistent with the module: x (B, C, H, W), patch P, d_model D.
    B, C, H, W = 2, 4, 16, 16
    P = 4
    D = 32

    key = jax.random.PRNGKey(0)
    kx, kw, kb = jax.random.split(key, 3)
    x = jax.random.normal(kx, (B, C, H, W), dtype=jnp.float32)
    weight = 0.05 * jax.random.normal(kw, (D, C, P, P), dtype=jnp.float32)
    bias = 0.05 * jax.random.normal(kb, (D,), dtype=jnp.float32)

    out = patch_embeddings(x, weight, bias, P)
    out = jax.block_until_ready(out)

    # Reference: Conv2d(stride=P, kernel=P) + flatten(2).transpose(1, 2)
    conv = jax.lax.conv_general_dilated(
        x,
        weight,
        window_strides=(P, P),
        padding="VALID",
        dimension_numbers=("NCHW", "OIHW", "NCHW"),
        precision=jax.lax.Precision.HIGHEST,
    )
    ref = (conv + bias[None, :, None, None]).reshape(B, D, -1).transpose(0, 2, 1)

    assert out.shape == (B, (H // P) * (W // P), D), f"bad shape {out.shape}"
    # bf16 MXU operands + f32 accumulation: comfortably within this tolerance.
    assert jnp.allclose(out, ref, atol=2e-2, rtol=2e-2), "patch-embedding mismatch"

    print("KERNEL_OK")
</pallas_src>

<mosaic_0001>
module attributes {stable_mosaic.version = 11 : i64} {
  func.func @_single_k_kernel(%arg0: i32, %arg1: i32, %arg2: memref<16x64xbf16, #tpu.memory_space<vmem>>, %arg3: memref<64x32xbf16, #tpu.memory_space<vmem>>, %arg4: memref<1x32xf32, #tpu.memory_space<vmem>>, %arg5: memref<16x32xf32, #tpu.memory_space<vmem>>) attributes {dimension_semantics = [#tpu.dimension_semantics<parallel>, #tpu.dimension_semantics<parallel>], iteration_bounds = array<i64: 2, 1>, scalar_prefetch = 0 : i64, scratch_operands = 0 : i64, tpu.core_type = #tpu.core_type<tc>, window_params = [{transform_indices = @transform_0, window_bounds = array<i64: 16, 64>}, {transform_indices = @transform_1, window_bounds = array<i64: 64, 32>}, {transform_indices = @transform_2, window_bounds = array<i64: 1, 32>}, {transform_indices = @transform_3, window_bounds = array<i64: 16, 32>}]} {
    %c0 = arith.constant 0 : index
    %c0_0 = arith.constant 0 : index
    %0 = vector.load %arg2[%c0, %c0_0] : memref<16x64xbf16, #tpu.memory_space<vmem>>, vector<16x64xbf16>
    %c0_1 = arith.constant 0 : index
    %c0_2 = arith.constant 0 : index
    %1 = vector.load %arg3[%c0_1, %c0_2] : memref<64x32xbf16, #tpu.memory_space<vmem>>, vector<64x32xbf16>
    %cst = arith.constant dense<0.000000e+00> : vector<16x32xf32>
    %2 = tpu.matmul %0, %1, %cst {dimension_numbers = #tpu.dot_dimension_numbers<[1], [0], [0], [1], [0, 0, 1, 1], [], []>} : vector<16x64xbf16>, vector<64x32xbf16>, vector<16x32xf32> -> vector<16x32xf32>
    %c0_3 = arith.constant 0 : index
    %c0_4 = arith.constant 0 : index
    %3 = vector.load %arg4[%c0_3, %c0_4] : memref<1x32xf32, #tpu.memory_space<vmem>>, vector<1x32xf32>
    %4 = vector.broadcast %3 : vector<1x32xf32> to vector<16x32xf32>
    %5 = arith.addf %2, %4 : vector<16x32xf32>
    %c0_5 = arith.constant 0 : index
    %c0_6 = arith.constant 0 : index
    %6 = vector.load %arg5[%c0_5, %c0_6] : memref<16x32xf32, #tpu.memory_space<vmem>>, vector<16x32xf32>
    tpu.vector_store %arg5[%c0_5, %c0_6], %5 {strides = array<i32>} : memref<16x32xf32, #tpu.memory_space<vmem>>, vector<16x32xf32>,
    return
  }
  func.func @transform_0(%arg0: i32, %arg1: i32) -> (i32, i32) {
    %c0_i32 = arith.constant 0 : i32
    %c0_i32_0 = arith.constant 0 : i32
    return %arg0, %c0_i32 : i32, i32
  }
  func.func @transform_1(%arg0: i32, %arg1: i32) -> (i32, i32) {
    %c0_i32 = arith.constant 0 : i32
    %c0_i32_0 = arith.constant 0 : i32
    return %c0_i32, %arg1 : i32, i32
  }
  func.func @transform_2(%arg0: i32, %arg1: i32) -> (i32, i32) {
    %c0_i32 = arith.constant 0 : i32
    %c0_i32_0 = arith.constant 0 : i32
    return %c0_i32, %arg1 : i32, i32
  }
  func.func @transform_3(%arg0: i32, %arg1: i32) -> (i32, i32) {
    %c0_i32 = arith.constant 0 : i32
    return %arg0, %arg1 : i32, i32
  }
}

</mosaic_0001>

<llo_original>
// kernel: tpu_custom_call.1
$region0: #{tpu_custom_call.1}
  #allocation0 [shape = 'u32[]', space=smem, size = 0x4, offset = 0x4, fixed_abs, tag = 'smem constant byte address 0x4 - core index']
  #allocation1 [shape = 'u32[144,128]{1,0:T(1,128)}', space=vmem, size = 0x12000, scoped, tag = 'internal scratch']
  %s0 = inlined_call_operand.vmem [shape: bf16[32,64], index: 0, kind: input, shape index: {}]
  %s1 = inlined_call_operand.vmem [shape: bf16[64,32], index: 1, kind: input, shape index: {}]
  %s2 = inlined_call_operand.vmem [shape: f32[1,32], index: 2, kind: input, shape index: {}]
  %s3 = inlined_call_operand.hbm [shape: f32[32,32], index: 3, kind: output, shape index: {}]
  %s4 = sld [smem:[#allocation0]]
  $region45: #{tpu_custom_call.1} parent=0
    _
  %s6 = ssub.s32 1, %s4
  %s7 = scalar_select 0, %s6, %s4
  $region1: #{tpu_custom_call.1} parent=0
    #allocation2 [shape = 'u8[16384]{0}', space=vmem, size = 0x4000, scoped, tag = 'output window, operand 0']
    #allocation3 [shape = 's32[2]{0}', space=sflag, size = 0x8, scoped, tag = 'scoped memory for tpu_custom_call.1']
    %8 = vsyncpa [#allocation3], 0
    %s9 = scalar_lea.sflag [#allocation3], 1
    %10 = vsyncpa %s9, 0
    loop: start=0, step=1, limit=4
    $region2: #{tpu_custom_call.1} parent=1 // loop_pre_header
      _
    $region3: #{tpu_custom_call.1} parent=1 // loop_header
      %s12 = sphi 0, %s16
      %p13 = scmp.ge.s32.totalorder %s12, 4
      %s19 = sphi 0, %s31
      %s20 = sphi 0, %s27
      %s21 = sphi 0, %s19
      %s22 = sphi 0, %s20
      %s23 = sphi 0, %s21
      %s24 = sphi 0, %s22
      %s34 = sphi 0, %s36
      %s37 = sphi 0, %s34
      %s38 = sphi 0, %s37
      %s54 = sphi 0, %s38
      %s60 = sphi 0, %s62
      %s63 = sphi 0, %s60
      %s64 = sphi 0, %s63
      %s80 = sphi 0, %s64
      %s86 = sphi 0, %s88
      %s89 = sphi 0, %s86
      %s90 = sphi 0, %s89
      %s106 = sphi 0, %s90
      %s114 = sphi 0, %s116
      %s117 = sphi 0, %s114
      %s118 = sphi 0, %s117
      %s134 = sphi 0, %s118
    $region4: #{tpu_custom_call.1} parent=1 // loop_header_branch
      %15 = sbr.rel (%p13) target = $region8
    $region5: #{tpu_custom_call.1} parent=1 // loop_body
      %s17 = ssub.s32 %s12, 1
      %s18 = ssub.s32 %s12, 2
      %s25 = sadd.s32 1, %s20
      %p26 = scmp.ge.s32.totalorder %s25, 1
      %s27 = scalar_select %p26, 0, %s25
      %s28 = sadd.s32 1, %s19
      %s29 = scalar_select %p26, %s28, %s19
      %p30 = scmp.ge.s32.totalorder %s29, 2
      %s31 = scalar_select %p30, 0, %s29
      %s32 = ssub.s32 %s19, %s31
      %p33 = scmp.eq.s32.totalorder %s32, 0
      %s35 = sadd.s32 %s34, 1
      %s36 = scalar_select %p33, %s34, %s35
      %p39 = pneg %p33
      %p40 = scmp.eq.s32.totalorder %s12, 1
      %p41 = por %p39, %p40
      %p42 = scmp.ne.s32.totalorder %s34, %s37
      %p43 = scmp.eq.s32.totalorder %s12, 0
      %p44 = por %p42, %p43
      %p45 = scmp.ne.s32.totalorder %s34, %s37
      %p46 = scmp.eq.s32.totalorder %s17, 1
      %p47 = por %p45, %p46
      %p48 = scmp.ne.s32.totalorder %s37, %s38
      %p49 = scmp.eq.s32.totalorder %s17, 0
      %p50 = por %p48, %p49
      %p51 = scmp.ne.s32.totalorder %s37, %s38
      %p52 = scmp.eq.s32.totalorder %s18, 1
      %p53 = por %p51, %p52
      %p55 = scmp.ne.s32.totalorder %s38, %s54
      %p56 = scmp.eq.s32.totalorder %s18, 0
      %p57 = por %p55, %p56
      %s58 = ssub.s32 %s20, %s27
      %p59 = scmp.eq.s32.totalorder %s58, 0
      %s61 = sadd.s32 %s60, 1
      %s62 = scalar_select %p59, %s60, %s61
      %p65 = pneg %p59
      %p66 = scmp.eq.s32.totalorder %s12, 1
      %p67 = por %p65, %p66
      %p68 = scmp.ne.s32.totalorder %s60, %s63
      %p69 = scmp.eq.s32.totalorder %s12, 0
      %p70 = por %p68, %p69
      %p71 = scmp.ne.s32.totalorder %s60, %s63
      %p72 = scmp.eq.s32.totalorder %s17, 1
      %p73 = por %p71, %p72
      %p74 = scmp.ne.s32.totalorder %s63, %s64
      %p75 = scmp.eq.s32.totalorder %s17, 0
      %p76 = por %p74, %p75
      %p77 = scmp.ne.s32.totalorder %s63, %s64
      %p78 = scmp.eq.s32.totalorder %s18, 1
      %p79 = por %p77, %p78
      %p81 = scmp.ne.s32.totalorder %s64, %s80
      %p82 = scmp.eq.s32.totalorder %s18, 0
      %p83 = por %p81, %p82
      %s84 = ssub.s32 %s20, %s27
      %p85 = scmp.eq.s32.totalorder %s84, 0
      %s87 = sadd.s32 %s86, 1
      %s88 = scalar_select %p85, %s86, %s87
      %p91 = pneg %p85
      %p92 = scmp.eq.s32.totalorder %s12, 1
      %p93 = por %p91, %p92
      %p94 = scmp.ne.s32.totalorder %s86, %s89
      %p95 = scmp.eq.s32.totalorder %s12, 0
      %p96 = por %p94, %p95
      %p97 = scmp.ne.s32.totalorder %s86, %s89
      %p98 = scmp.eq.s32.totalorder %s17, 1
      %p99 = por %p97, %p98
      %p100 = scmp.ne.s32.totalorder %s89, %s90
      %p101 = scmp.eq.s32.totalorder %s17, 0
      %p102 = por %p100, %p101
      %p103 = scmp.ne.s32.totalorder %s89, %s90
      %p104 = scmp.eq.s32.totalorder %s18, 1
      %p105 = por %p103, %p104
      %p107 = scmp.ne.s32.totalorder %s90, %s106
      %p108 = scmp.eq.s32.totalorder %s18, 0
      %p109 = por %p107, %p108
      %s110 = ssub.s32 %s19, %s31
      %s111 = ssub.s32 %s20, %s27
      %s112 = sor.u32 %s110, %s111
      %p113 = scmp.eq.s32.totalorder %s112, 0
      %s115 = sadd.s32 %s114, 1
      %s116 = scalar_select %p113, %s114, %s115
      %p119 = pneg %p113
      %p120 = scmp.eq.s32.totalorder %s12, 1
      %p121 = por %p119, %p120
      %p122 = scmp.ne.s32.totalorder %s114, %s117
      %p123 = scmp.eq.s32.totalorder %s12, 0
      %p124 = por %p122, %p123
      %p125 = scmp.ne.s32.totalorder %s114, %s117
      %p126 = scmp.eq.s32.totalorder %s17, 1
      %p127 = por %p125, %p126
      %p128 = scmp.ne.s32.totalorder %s117, %s118
      %p129 = scmp.eq.s32.totalorder %s17, 0
      %p130 = por %p128, %p129
      %p131 = scmp.ne.s32.totalorder %s117, %s118
      %p132 = scmp.eq.s32.totalorder %s18, 1
      %p133 = por %p131, %p132
      %p135 = scmp.ne.s32.totalorder %s118, %s134
      %p136 = scmp.eq.s32.totalorder %s18, 0
      %p137 = por %p135, %p136
      %p138 = scmp.le.s32.totalorder 1, %s12
      %p139 = scmp.lt.s32.totalorder %s12, 3
      %p140 = pnand %p138, %p139
      %p141 = pneg %p140
      // Predicated region
      $region9: #{tpu_custom_call.1} parent=5 // pred_check
        _
      $region10: #{tpu_custom_call.1} parent=5 // pred_check_branch
        %143 = sbr.rel (%p140) target = $region12
      $region11: #{tpu_custom_call.1} parent=5 // pred_region
        %s144 = ssub.s32 %s12, 1
        // Predicated region
        $region13: #{tpu_custom_call.1} parent=11 // pred_check
          %p145 = pneg %p76
        $region14: #{tpu_custom_call.1} parent=11 // pred_check_branch
          %147 = sbr.rel (%p145) target = $region16
        $region15: #{tpu_custom_call.1} parent=11 // pred_region
          %p148 = scmp.lt.s32.totalorder %s22, 0
          %s149 = scalar_select %p148, %s22, 0
          %s150 = smul.addr %s149, 4
          %s151 = scalar_lea.vmem %s1, %s150
        $region16: #{tpu_custom_call.1} parent=11 // pred_fallthru
          _
        // Predicated region
        $region17: #{tpu_custom_call.1} parent=11 // pred_check
          %p152 = pneg %p102
        $region18: #{tpu_custom_call.1} parent=11 // pred_check_branch
          %154 = sbr.rel (%p152) target = $region20
        $region19: #{tpu_custom_call.1} parent=11 // pred_region
          %p155 = scmp.lt.s32.totalorder %s22, 0
          %s156 = scalar_select %p155, %s22, 0
          %s157 = scalar_lea.vmem %s2, %s156
        $region20: #{tpu_custom_call.1} parent=11 // pred_fallthru
          _
      $region12: #{tpu_custom_call.1} parent=5 // pred_fallthru
        _
      %p158 = scmp.lt.s32.totalorder %s12, 2
      // Predicated region
      $region21: #{tpu_custom_call.1} parent=5 // pred_check
        %p159 = pneg %p158
      $region22: #{tpu_custom_call.1} parent=5 // pred_check_branch
        %161 = sbr.rel (%p159) target = $region24
      $region23: #{tpu_custom_call.1} parent=5 // pred_region
        // Predicated region
        $region25: #{tpu_custom_call.1} parent=23 // pred_check
          %p162 = pneg %p44
        $region26: #{tpu_custom_call.1} parent=23 // pred_check_branch
          %164 = sbr.rel (%p162) target = $region28
        $region27: #{tpu_custom_call.1} parent=23 // pred_region
          %s165 = smul.u32 2, %s19
          %p166 = scmp.lt.s32.totalorder %s165, 3
          %s167 = scalar_select %p166, %s165, 3
          %s168 = smul.addr %s167, 4
          %s169 = scalar_lea.vmem %s0, %s168
          %s170 = smul.u32 2, %s19
        $region28: #{tpu_custom_call.1} parent=23 // pred_fallthru
          _
      $region24: #{tpu_custom_call.1} parent=5 // pred_fallthru
        _
      %p171 = scmp.le.s32.totalorder 1, %s12
      %p172 = scmp.lt.s32.totalorder %s12, 3
      %p173 = pnand %p171, %p172
      %p174 = pneg %p173
      // Predicated region
      $region29: #{tpu_custom_call.1} parent=5 // pred_check
        _
      $region30: #{tpu_custom_call.1} parent=5 // pred_check_branch
        %176 = sbr.rel (%p173) target = $region32
      $region31: #{tpu_custom_call.1} parent=5 // pred_region
        %s177 = ssub.s32 %s12, 1
        %s178 = smul.u32 2, %s21
        %p179 = scmp.lt.s32.totalorder %s178, 3
        %s180 = scalar_select %p179, %s178, 3
        %s181 = smul.addr %s180, 4
        %s182 = scalar_lea.vmem %s0, %s181
        %p183 = pneg %p50
        %p184 = pneg %p47
        %p185 = scmp.lt.s32.totalorder %s22, 0
        %s186 = scalar_select %p185, %s22, 0
        %s187 = smul.addr %s186, 4
        %s188 = scalar_lea.vmem %s1, %s187
        %p189 = pneg %p76
        %p190 = pneg %p73
        %p191 = scmp.lt.s32.totalorder %s22, 0
        %s192 = scalar_select %p191, %s22, 0
        %s193 = scalar_lea.vmem %s2, %s192
        %p194 = pneg %p102
        %p195 = pneg %p99
        %p196 = pneg %p130
        %p197 = pneg %p127
        %s198 = sand.u32 %s117, 1
        %s199 = scalar_lea.sflag [#allocation3], %s198
        %s200 = sand.u32 %s117, 1
        %s201 = smul.addr %s200, 16
        %s202 = scalar_lea.vmem [#allocation2], %s201
        %s203 = smul.u32 2, %s21
        %p204 = scmp.lt.s32.totalorder %s203, 3
        %s205 = scalar_select %p204, %s203, 3
        %s206 = smul.addr %s205, 4
        %s207 = scalar_lea.vmem %s0, %s206
        %s208 = smul.u32 2, %s21
        %p209 = scmp.lt.s32.totalorder %s22, 0
        %s210 = scalar_select %p209, %s22, 0
        %s211 = smul.addr %s210, 4
        %s212 = scalar_lea.vmem %s1, %s211
        %p213 = scmp.lt.s32.totalorder %s22, 0
        %s214 = scalar_select %p213, %s22, 0
        %s215 = scalar_lea.vmem %s2, %s214
        %s216 = smul.u32 2, %s21
        %v218 = vld [vmem:[%s207] sm:$0xf]
        %v219 = vld [vmem:[%s207 + $0x4] sm:$0xf]
        %v220 = vld [vmem:[%s212] sm:$0xf]
        %v221 = vld [vmem:[%s212 + $0x4] sm:$0xf]
        %v222 = vld [vmem:[%s212 + $0x8] sm:$0xf]
        %v223 = vld [vmem:[%s212 + $0xc] sm:$0xf]
        %v224 = vld [vmem:[%s212 + $0x10] sm:$0xf]
        %v225 = vld [vmem:[%s212 + $0x14] sm:$0xf]
        %v226 = vld [vmem:[%s212 + $0x18] sm:$0xf]
        %v227 = vld [vmem:[%s212 + $0x1c] sm:$0xf]
        %v228 = vld [vmem:[%s215] sm:$0x1]
        %v230 = vlaneseq
        %v231 = vshrl.u32 %v230, 7
        %v232 = vsub.s32 0, %v231
        %v233 = vrot.slane %v228, %v232
        %v237 = vunpack.c.l.b16 %v218
        %v238 = vunpack.c.l.b16 %v219
        %v239 = vpack.c.b16 %v238, %v237
        %v248 = vunpack.c.l.b16 %v220
        %v249 = vunpack.c.l.b16 %v221
        %v250 = vunpack.c.l.b16 %v222
        %v251 = vunpack.c.l.b16 %v223
        %v252 = vunpack.c.l.b16 %v224
        %v253 = vunpack.c.l.b16 %v225
        %v254 = vunpack.c.l.b16 %v226
        %v255 = vunpack.c.l.b16 %v227
        %v256 = vpack.c.b16 %v249, %v248
        %v257 = vpack.c.b16 %v251, %v250
        %v258 = vpack.c.b16 %v253, %v252
        %v259 = vpack.c.b16 %v255, %v254
        %vm264 = vcmask 523264
        %v266 = vsel %vm264, %v239, 0
        %268 = vmatprep.subr.bf16.mxu0 0
        %269 = vmatpush1.bf16.msra.mxu0 %v256
        %270 = vmatprep.subr.bf16.mxu0 0
        %271 = vmatpush1.bf16.msra.mxu0 %v257
        %272 = vmatprep.subr.bf16.mxu0 0
        %273 = vmatpush1.bf16.msra.mxu0 %v258
        %274 = vmatprep.subr.bf16.mxu0 0
        %275 = vmatpush1.bf16.msra.mxu0 %v259
        %276 = vmatprep.subr.bf16.mxu0 0
        %277 = vmatpush1.bf16.msra.mxu0 0
        %278 = vmatprep.subr.bf16.mxu0 0
        %279 = vmatpush1.bf16.msra.mxu0 0
        %280 = vmatprep.subr.bf16.mxu0 0
        %281 = vmatpush1.bf16.msra.mxu0 0
        %282 = vmatprep.subr.bf16.mxu0 0
        %283 = vmatpush1.bf16.msra.mxu0 0
        %284 = vmatprep.subr.bf16.mxu0 0
        %285 = vmatpush1.bf16.msra.mxu0 0
        %286 = vmatprep.subr.bf16.mxu0 0
        %287 = vmatpush1.bf16.msra.mxu0 0
        %288 = vmatprep.subr.bf16.mxu0 0
        %289 = vmatpush1.bf16.msra.mxu0 0
        %290 = vmatprep.subr.bf16.mxu0 0
        %291 = vmatpush1.bf16.msra.mxu0 0
        %292 = vmatprep.subr.bf16.mxu0 0
        %293 = vmatpush1.bf16.msra.mxu0 0
        %294 = vmatprep.subr.bf16.mxu0 0
        %295 = vmatpush1.bf16.msra.mxu0 0
        %296 = vmatprep.subr.bf16.mxu0 0
        %297 = vmatpush1.bf16.msra.mxu0 0
        %298 = vmatprep.subr.bf16.mxu0 0
        %299 = vmatpush1.bf16.msra.mxu0 0
        %300 = vmatprep.mubr.bf16.mxu0 0
        %301 = vmatmul.mubr.bf16.gmra.mrb[0].mxu0 %v266
        %v302 = vpop.f32.mrb[0].mxu0
        %v303 = vadd.f32 %v233, %v302
        %v304 = vpop.f32.mrb[0].mxu0
        %v305 = vpop.f32.mrb[0].mxu0
        %v306 = vadd.f32 %v233, %v305
        %v307 = vpop.f32.mrb[0].mxu0
        %308 = vdwg.mxu0
        %vm309 = vcmask 261120
        %310 = vst.msk [vmem:[%s202] sm:$0xff] %vm309, %v303
        %311 = vst.msk [vmem:[%s202 + $0x8] sm:$0xff] %vm309, %v306
        %s312 = sand.u32 %s117, 1
        %s313 = scalar_lea.sflag [#allocation3], %s312
        %s314 = sand.u32 %s117, 1
        %s315 = smul.addr %s314, 16
        %s316 = scalar_lea.vmem [#allocation2], %s315
        // Predicated region
        $region33: #{tpu_custom_call.1} parent=31 // pred_check
          %p317 = pneg %p127
        $region34: #{tpu_custom_call.1} parent=31 // pred_check_branch
          %319 = sbr.rel (%p317) target = $region36
        $region35: #{tpu_custom_call.1} parent=31 // pred_region
          %s320 = smul.u32 2, %s21
          %s322 = ssub.s32 256, 256
          %323 = vsyncadd %s313, %s322
          %s324 = sadd.s32 %s22, %s320
          %s325 = smul.addr %s324, 128
          %s326 = scalar_lea.hbm %s3, %s325
          %s327 = sshll.u32 %s316, 4
          %s328 = int_to_ptr.vmem [resolvable:$true] %s327
          %333 = dma.vmem_to_hbm [thread:$0]  %s328, 256, %s326, %s313, 128, 128, 8
        $region36: #{tpu_custom_call.1} parent=31 // pred_fallthru
          _
      $region32: #{tpu_custom_call.1} parent=5 // pred_fallthru
        _
      %p334 = scmp.le.s32.totalorder 2, %s12
      // Predicated region
      $region37: #{tpu_custom_call.1} parent=5 // pred_check
        %p335 = pneg %p334
      $region38: #{tpu_custom_call.1} parent=5 // pred_check_branch
        %337 = sbr.rel (%p335) target = $region40
      $region39: #{tpu_custom_call.1} parent=5 // pred_region
        %s338 = ssub.s32 %s12, 2
        // Predicated region
        $region41: #{tpu_custom_call.1} parent=39 // pred_check
          %p339 = pneg %p133
        $region42: #{tpu_custom_call.1} parent=39 // pred_check_branch
          %341 = sbr.rel (%p339) target = $region44
        $region43: #{tpu_custom_call.1} parent=39 // pred_region
          %s342 = sand.u32 %s118, 1
          %s343 = scalar_lea.sflag [#allocation3], %s342
          %s344 = sand.u32 %s118, 1
          %s345 = smul.addr %s344, 16
          %s346 = scalar_lea.vmem [#allocation2], %s345
          %347 = dma.done %s343, 256
        $region44: #{tpu_custom_call.1} parent=39 // pred_fallthru
          _
      $region40: #{tpu_custom_call.1} parent=5 // pred_fallthru
        _
    $region6: #{tpu_custom_call.1} parent=1 // loop_footer
      %s16 = sadd.s32 1, %s12
    $region7: #{tpu_custom_call.1} parent=1 // loop_footer_branch
      %11 = sbr.rel target = $region3
    $region8: #{tpu_custom_call.1} parent=1 // loop_exit
      _
    %348 = vsyncpa [#allocation3], 1
    %s349 = scalar_lea.sflag [#allocation3], 1
    %350 = vsyncpa %s349, 1

</llo_original>
